<compile_context>
chip_gen: v7x
topology: tpu7x:2x2x1
jax: 0.10.0
libtpu: 0.0.40
codegen_flags: <defaults>
</compile_context>

<pallas_src>
import functools

import jax
import jax.numpy as jnp
from jax.experimental import pallas as pl
from jax.experimental.pallas import tpu as pltpu

_IN = 4
_HIDDEN = 256
_LANE = 128  # output lane padding target


def _qnet_kernel(x_ref, w1_ref, b1_ref, w2_ref, b2_ref, o_ref):
    # fc1: (bm, 4) @ (4, 256) + b1, done on the VPU (K=4 is pure MXU latency).
    x = x_ref[...]          # (bm, 4)
    w1 = w1_ref[...]        # (4, 256)
    h = x[:, 0:1] * w1[0:1, :]
    for k in range(1, _IN):
        h = h + x[:, k:k + 1] * w1[k:k + 1, :]
    h = jnp.maximum(h + b1_ref[...], 0.0)
    # fc2: (bm, 256) @ (256, 128 lane-padded) + b2 on the MXU, f32 accumulate.
    out = jnp.dot(h, w2_ref[...], preferred_element_type=jnp.float32)
    o_ref[...] = (out + b2_ref[...]).astype(o_ref.dtype)


def _round_up(n, m):
    return ((n + m - 1) // m) * m


@functools.partial(jax.jit, static_argnames=("block_batch",))
def qnet_forward(x, w1, b1, w2, b2, *, block_batch=512):
    """Forward pass of Qnet. Both matmuls, bias adds and the ReLU run inside one
    Pallas kernel, tiled over the batch with weights resident in VMEM."""
    B = x.shape[0]
    out_size = w2.shape[1]

    # Lane-pad fc2 weights/bias with zeros so the output store is lane-dense.
    n_pad = _round_up(max(out_size, 1), _LANE)
    w2_p = jnp.zeros((_HIDDEN, n_pad), w2.dtype).at[:, :out_size].set(w2)
    b2_p = jnp.zeros((1, n_pad), b2.dtype).at[:, :out_size].set(b2)

    # Pick a batch tile (multiple of 8 sublanes) and pad the batch to it.
    bm = min(block_batch, _round_up(B, 8))
    bm = _round_up(bm, 8)
    b_pad = _round_up(B, bm)
    x_p = x if b_pad == B else jnp.zeros((b_pad, _IN), x.dtype).at[:B].set(x)

    grid = (b_pad // bm,)
    out_padded = pl.pallas_call(
        _qnet_kernel,
        out_shape=jax.ShapeDtypeStruct((b_pad, n_pad), x.dtype),
        grid_spec=pl.GridSpec(
            grid=grid,
            in_specs=[
                pl.BlockSpec((bm, _IN), lambda i: (i, 0)),        # x tile
                pl.BlockSpec((_IN, _HIDDEN), lambda i: (0, 0)),   # w1 (resident)
                pl.BlockSpec((1, _HIDDEN), lambda i: (0, 0)),     # b1 (resident)
                pl.BlockSpec((_HIDDEN, n_pad), lambda i: (0, 0)),  # w2 (resident)
                pl.BlockSpec((1, n_pad), lambda i: (0, 0)),       # b2 (resident)
            ],
            out_specs=pl.BlockSpec((bm, n_pad), lambda i: (i, 0)),
        ),
        compiler_params=pltpu.CompilerParams(
            dimension_semantics=("parallel",),  # shard batch over v7x's 2 TCs
        ),
    )(x_p, w1, b1, w2_p, b2_p)

    return out_padded[:B, :out_size]


def init_qnet_params(key, output_size, dtype=jnp.float32):
    """Deterministic init matching nn.Linear's default U(-1/sqrt(fan_in), ...)."""
    k1, k2, k3, k4 = jax.random.split(key, 4)
    bound1 = 1.0 / jnp.sqrt(_IN)
    bound2 = 1.0 / jnp.sqrt(_HIDDEN)
    w1 = jax.random.uniform(k1, (_IN, _HIDDEN), dtype, -bound1, bound1)
    b1 = jax.random.uniform(k2, (1, _HIDDEN), dtype, -bound1, bound1)
    w2 = jax.random.uniform(k3, (_HIDDEN, output_size), dtype, -bound2, bound2)
    b2 = jax.random.uniform(k4, (1, output_size), dtype, -bound2, bound2)
    return w1, b1, w2, b2


def qnet_reference(x, w1, b1, w2, b2):
    """Pure-JAX reference for correctness checking."""
    h = jnp.maximum(x @ w1 + b1, 0.0)
    return h @ w2 + b2


if __name__ == "__main__":
    key = jax.random.PRNGKey(0)
    k_param, k_x1, k_x2 = jax.random.split(key, 3)

    output_size = 2  # Qnet(output_size); sample_action implies 2 actions
    w1, b1, w2, b2 = init_qnet_params(k_param, output_size)

    # Small single-observation-style batch (grid of 1 tile).
    batch = 8
    x = jax.random.normal(k_x1, (batch, _IN), jnp.float32)
    out = qnet_forward(x, w1, b1, w2, b2)
    jax.block_until_ready(out)
    ref = qnet_reference(x, w1, b1, w2, b2)
    assert out.shape == (batch, output_size), out.shape
    assert jnp.allclose(out, ref, atol=1e-5, rtol=1e-5), "mismatch vs reference (small batch)"

    # Ragged replay-buffer-style batch: exercises batch padding + multi-tile grid.
    batch2 = 1037
    x2 = jax.random.normal(k_x2, (batch2, _IN), jnp.float32)
    out2 = qnet_forward(x2, w1, b1, w2, b2)
    jax.block_until_ready(out2)
    ref2 = qnet_reference(x2, w1, b1, w2, b2)
    assert out2.shape == (batch2, output_size), out2.shape
    assert jnp.allclose(out2, ref2, atol=1e-5, rtol=1e-5), "mismatch vs reference (large batch)"

    print("KERNEL_OK")
</pallas_src>

<mosaic_0001>
module attributes {stable_mosaic.version = 11 : i64} {
  func.func @_qnet_kernel(%arg0: i32, %arg1: memref<8x4xf32, #tpu.memory_space<vmem>>, %arg2: memref<4x256xf32, #tpu.memory_space<vmem>>, %arg3: memref<1x256xf32, #tpu.memory_space<vmem>>, %arg4: memref<256x128xf32, #tpu.memory_space<vmem>>, %arg5: memref<1x128xf32, #tpu.memory_space<vmem>>, %arg6: memref<8x128xf32, #tpu.memory_space<vmem>>) attributes {dimension_semantics = [#tpu.dimension_semantics<parallel>], iteration_bounds = array<i64: 1>, scalar_prefetch = 0 : i64, scratch_operands = 0 : i64, tpu.core_type = #tpu.core_type<tc>, window_params = [{transform_indices = @transform_0, window_bounds = array<i64: 8, 4>}, {pipeline_mode = #tpu.pipeline_mode<synchronous>, transform_indices = @transform_1, window_bounds = array<i64: 4, 256>}, {pipeline_mode = #tpu.pipeline_mode<synchronous>, transform_indices = @transform_2, window_bounds = array<i64: 1, 256>}, {pipeline_mode = #tpu.pipeline_mode<synchronous>, transform_indices = @transform_3, window_bounds = array<i64: 256, 128>}, {pipeline_mode = #tpu.pipeline_mode<synchronous>, transform_indices = @transform_4, window_bounds = array<i64: 1, 128>}, {transform_indices = @transform_5, window_bounds = array<i64: 8, 128>}]} {
    %c0 = arith.constant 0 : index
    %c0_0 = arith.constant 0 : index
    %0 = vector.load %arg1[%c0, %c0_0] : memref<8x4xf32, #tpu.memory_space<vmem>>, vector<8x4xf32>
    %c0_1 = arith.constant 0 : index
    %c0_2 = arith.constant 0 : index
    %1 = vector.load %arg2[%c0_1, %c0_2] : memref<4x256xf32, #tpu.memory_space<vmem>>, vector<4x256xf32>
    %2 = vector.extract_strided_slice %0 {offsets = [0, 0], sizes = [8, 1], strides = [1, 1]} : vector<8x4xf32> to vector<8x1xf32>
    %3 = vector.extract_strided_slice %1 {offsets = [0, 0], sizes = [1, 256], strides = [1, 1]} : vector<4x256xf32> to vector<1x256xf32>
    %4 = vector.broadcast %2 : vector<8x1xf32> to vector<8x256xf32>
    %5 = vector.broadcast %3 : vector<1x256xf32> to vector<8x256xf32>
    %6 = arith.mulf %4, %5 : vector<8x256xf32>
    %7 = vector.extract_strided_slice %0 {offsets = [0, 1], sizes = [8, 1], strides = [1, 1]} : vector<8x4xf32> to vector<8x1xf32>
    %8 = vector.extract_strided_slice %1 {offsets = [1, 0], sizes = [1, 256], strides = [1, 1]} : vector<4x256xf32> to vector<1x256xf32>
    %9 = vector.broadcast %7 : vector<8x1xf32> to vector<8x256xf32>
    %10 = vector.broadcast %8 : vector<1x256xf32> to vector<8x256xf32>
    %11 = arith.mulf %9, %10 : vector<8x256xf32>
    %12 = arith.addf %6, %11 : vector<8x256xf32>
    %13 = vector.extract_strided_slice %0 {offsets = [0, 2], sizes = [8, 1], strides = [1, 1]} : vector<8x4xf32> to vector<8x1xf32>
    %14 = vector.extract_strided_slice %1 {offsets = [2, 0], sizes = [1, 256], strides = [1, 1]} : vector<4x256xf32> to vector<1x256xf32>
    %15 = vector.broadcast %13 : vector<8x1xf32> to vector<8x256xf32>
    %16 = vector.broadcast %14 : vector<1x256xf32> to vector<8x256xf32>
    %17 = arith.mulf %15, %16 : vector<8x256xf32>
    %18 = arith.addf %12, %17 : vector<8x256xf32>
    %19 = vector.extract_strided_slice %0 {offsets = [0, 3], sizes = [8, 1], strides = [1, 1]} : vector<8x4xf32> to vector<8x1xf32>
    %20 = vector.extract_strided_slice %1 {offsets = [3, 0], sizes = [1, 256], strides = [1, 1]} : vector<4x256xf32> to vector<1x256xf32>
    %21 = vector.broadcast %19 : vector<8x1xf32> to vector<8x256xf32>
    %22 = vector.broadcast %20 : vector<1x256xf32> to vector<8x256xf32>
    %23 = arith.mulf %21, %22 : vector<8x256xf32>
    %24 = arith.addf %18, %23 : vector<8x256xf32>
    %c0_3 = arith.constant 0 : index
    %c0_4 = arith.constant 0 : index
    %25 = vector.load %arg3[%c0_3, %c0_4] : memref<1x256xf32, #tpu.memory_space<vmem>>, vector<1x256xf32>
    %26 = vector.broadcast %25 : vector<1x256xf32> to vector<8x256xf32>
    %27 = arith.addf %24, %26 : vector<8x256xf32>
    %cst = arith.constant 0.000000e+00 : f32
    %28 = vector.broadcast %cst : f32 to vector<8x256xf32>
    %29 = arith.maximumf %27, %28 : vector<8x256xf32>
    %c0_5 = arith.constant 0 : index
    %c0_6 = arith.constant 0 : index
    %30 = vector.load %arg4[%c0_5, %c0_6] : memref<256x128xf32, #tpu.memory_space<vmem>>, vector<256x128xf32>
    %cst_7 = arith.constant dense<0.000000e+00> : vector<8x128xf32>
    %31 = tpu.matmul %29, %30, %cst_7 {dimension_numbers = #tpu.dot_dimension_numbers<[1], [0], [0], [1], [0, 0, 1, 1], [], []>} : vector<8x256xf32>, vector<256x128xf32>, vector<8x128xf32> -> vector<8x128xf32>
    %c0_8 = arith.constant 0 : index
    %c0_9 = arith.constant 0 : index
    %32 = vector.load %arg5[%c0_8, %c0_9] : memref<1x128xf32, #tpu.memory_space<vmem>>, vector<1x128xf32>
    %33 = vector.broadcast %32 : vector<1x128xf32> to vector<8x128xf32>
    %34 = arith.addf %31, %33 : vector<8x128xf32>
    %c0_10 = arith.constant 0 : index
    %c0_11 = arith.constant 0 : index
    %35 = vector.load %arg6[%c0_10, %c0_11] : memref<8x128xf32, #tpu.memory_space<vmem>>, vector<8x128xf32>
    tpu.vector_store %arg6[%c0_10, %c0_11], %34 {strides = array<i32>} : memref<8x128xf32, #tpu.memory_space<vmem>>, vector<8x128xf32>,
    return
  }
  func.func @transform_0(%arg0: i32) -> (i32, i32) {
    %c0_i32 = arith.constant 0 : i32
    %c0_i32_0 = arith.constant 0 : i32
    return %arg0, %c0_i32 : i32, i32
  }
  func.func @transform_1(%arg0: i32) -> (i32, i32) {
    %c0_i32 = arith.constant 0 : i32
    %c0_i32_0 = arith.constant 0 : i32
    %c0_i32_1 = arith.constant 0 : i32
    return %c0_i32, %c0_i32_0 : i32, i32
  }
  func.func @transform_2(%arg0: i32) -> (i32, i32) {
    %c0_i32 = arith.constant 0 : i32
    %c0_i32_0 = arith.constant 0 : i32
    %c0_i32_1 = arith.constant 0 : i32
    return %c0_i32, %c0_i32_0 : i32, i32
  }
  func.func @transform_3(%arg0: i32) -> (i32, i32) {
    %c0_i32 = arith.constant 0 : i32
    %c0_i32_0 = arith.constant 0 : i32
    %c0_i32_1 = arith.constant 0 : i32
    return %c0_i32, %c0_i32_0 : i32, i32
  }
  func.func @transform_4(%arg0: i32) -> (i32, i32) {
    %c0_i32 = arith.constant 0 : i32
    %c0_i32_0 = arith.constant 0 : i32
    %c0_i32_1 = arith.constant 0 : i32
    return %c0_i32, %c0_i32_0 : i32, i32
  }
  func.func @transform_5(%arg0: i32) -> (i32, i32) {
    %c0_i32 = arith.constant 0 : i32
    %c0_i32_0 = arith.constant 0 : i32
    return %arg0, %c0_i32 : i32, i32
  }
}

</mosaic_0001>

<llo_original>
// kernel: qnet_forward.1
$region0: #{qnet_forward.1}
  #allocation0 [shape = 'u32[]', space=smem, size = 0x4, offset = 0x4, fixed_abs, tag = 'smem constant byte address 0x4 - core index']
  #allocation1 [shape = 'u32[144,128]{1,0:T(1,128)}', space=vmem, size = 0x12000, scoped, tag = 'internal scratch']
  %s0 = inlined_call_operand.vmem [shape: f32[8,4], index: 0, kind: input, shape index: {}]
  %s1 = inlined_call_operand.vmem [shape: f32[4,256], index: 1, kind: input, shape index: {}]
  %s2 = inlined_call_operand.vmem [shape: f32[1,256], index: 2, kind: input, shape index: {}]
  %s3 = inlined_call_operand.vmem [shape: f32[256,128], index: 3, kind: input, shape index: {}]
  %s4 = inlined_call_operand.vmem [shape: f32[1,128], index: 4, kind: input, shape index: {}]
  %s5 = inlined_call_operand.vmem [shape: f32[8,128], index: 5, kind: output, shape index: {}]
  %s6 = sld [smem:[#allocation0]]
  $region30: #{qnet_forward.1} parent=0
    _
  %s8 = ssub.s32 1, %s6
  %s9 = scalar_select 0, %s8, %s6
  // Predicated region
  $region2: #{qnet_forward.1} parent=0 // pred_check
    _
  $region3: #{qnet_forward.1} parent=0 // pred_check_branch
    %11 = sbr.rel (0) target = $region5
  $region4: #{qnet_forward.1} parent=0 // pred_region
    _
  $region5: #{qnet_forward.1} parent=0 // pred_fallthru
    _
  // Predicated region
  $region6: #{qnet_forward.1} parent=0 // pred_check
    _
  $region7: #{qnet_forward.1} parent=0 // pred_check_branch
    %13 = sbr.rel (0) target = $region9
  $region8: #{qnet_forward.1} parent=0 // pred_region
    _
  $region9: #{qnet_forward.1} parent=0 // pred_fallthru
    _
  // Predicated region
  $region10: #{qnet_forward.1} parent=0 // pred_check
    _
  $region11: #{qnet_forward.1} parent=0 // pred_check_branch
    %15 = sbr.rel (0) target = $region13
  $region12: #{qnet_forward.1} parent=0 // pred_region
    _
  $region13: #{qnet_forward.1} parent=0 // pred_fallthru
    _
  // Predicated region
  $region14: #{qnet_forward.1} parent=0 // pred_check
    _
  $region15: #{qnet_forward.1} parent=0 // pred_check_branch
    %17 = sbr.rel (0) target = $region17
  $region16: #{qnet_forward.1} parent=0 // pred_region
    _
  $region17: #{qnet_forward.1} parent=0 // pred_fallthru
    _
  // Predicated region
  $region18: #{qnet_forward.1} parent=0 // pred_check
    _
  $region19: #{qnet_forward.1} parent=0 // pred_check_branch
    %19 = sbr.rel (0) target = $region21
  $region20: #{qnet_forward.1} parent=0 // pred_region
    _
  $region21: #{qnet_forward.1} parent=0 // pred_fallthru
    _
  %v20 = vld [vmem:[%s0] sm:$0xff]
  %v21 = vld [vmem:[%s1] sm:$0xff]
  %23 = vset.pattern.permute.xlu0 0
  %24 = vperm.xlu0 %23, %v20
  %v25 = vpop.permute.xlu0 %24
  %v28 = vlaneseq
  %v29 = vshrl.u32 %v28, 7
  %v30 = vsub.s32 0, %v29
  %v31 = vrot.slane %v21, %v30
  %v32 = vlaneseq
  %v33 = vshrl.u32 %v32, 7
  %v34 = vsub.s32 4, %v33
  %v35 = vrot.slane %v21, %v34
  %v38 = vlaneseq
  %v39 = vshrl.u32 %v38, 7
  %v40 = vsub.s32 0, %v39
  %v41 = vrot.slane %v31, %v40
  %v42 = vlaneseq
  %v43 = vshrl.u32 %v42, 7
  %v44 = vsub.s32 0, %v43
  %v45 = vrot.slane %v35, %v44
  %v46 = vmul.f32 %v25, %v41
  %v47 = vmul.f32 %v25, %v45
  %48 = vset.pattern.permute.xlu0 1
  %49 = vperm.xlu0 %48, %v20
  %v50 = vpop.permute.xlu0 %49
  %v52 = vlaneseq
  %v53 = vshrl.u32 %v52, 7
  %v54 = vsub.s32 1, %v53
  %v55 = vrot.slane %v21, %v54
  %v56 = vlaneseq
  %v57 = vshrl.u32 %v56, 7
  %v58 = vsub.s32 5, %v57
  %v59 = vrot.slane %v21, %v58
  %v62 = vlaneseq
  %v63 = vshrl.u32 %v62, 7
  %v64 = vsub.s32 1, %v63
  %v65 = vrot.slane %v55, %v64
  %v66 = vlaneseq
  %v67 = vshrl.u32 %v66, 7
  %v68 = vsub.s32 1, %v67
  %v69 = vrot.slane %v59, %v68
  %v70 = vmul.f32 %v50, %v65
  %v71 = vmul.f32 %v50, %v69
  %v72 = vadd.f32 %v46, %v70
  %v73 = vadd.f32 %v47, %v71
  %74 = vset.pattern.permute.xlu0 2
  %75 = vperm.xlu0 %74, %v20
  %v76 = vpop.permute.xlu0 %75
  %v78 = vlaneseq
  %v79 = vshrl.u32 %v78, 7
  %v80 = vsub.s32 2, %v79
  %v81 = vrot.slane %v21, %v80
  %v82 = vlaneseq
  %v83 = vshrl.u32 %v82, 7
  %v84 = vsub.s32 6, %v83
  %v85 = vrot.slane %v21, %v84
  %v88 = vlaneseq
  %v89 = vshrl.u32 %v88, 7
  %v90 = vsub.s32 2, %v89
  %v91 = vrot.slane %v81, %v90
  %v92 = vlaneseq
  %v93 = vshrl.u32 %v92, 7
  %v94 = vsub.s32 2, %v93
  %v95 = vrot.slane %v85, %v94
  %v96 = vmul.f32 %v76, %v91
  %v97 = vmul.f32 %v76, %v95
  %v98 = vadd.f32 %v72, %v96
  %v99 = vadd.f32 %v73, %v97
  %100 = vset.pattern.permute.xlu0 3
  %101 = vperm.xlu0 %100, %v20
  %v102 = vpop.permute.xlu0 %101
  %v104 = vlaneseq
  %v105 = vshrl.u32 %v104, 7
  %v106 = vsub.s32 3, %v105
  %v107 = vrot.slane %v21, %v106
  %v108 = vlaneseq
  %v109 = vshrl.u32 %v108, 7
  %v110 = vsub.s32 7, %v109
  %v111 = vrot.slane %v21, %v110
  %v114 = vlaneseq
  %v115 = vshrl.u32 %v114, 7
  %v116 = vsub.s32 3, %v115
  %v117 = vrot.slane %v107, %v116
  %v118 = vlaneseq
  %v119 = vshrl.u32 %v118, 7
  %v120 = vsub.s32 3, %v119
  %v121 = vrot.slane %v111, %v120
  %v122 = vmul.f32 %v102, %v117
  %v123 = vmul.f32 %v102, %v121
  %v124 = vadd.f32 %v98, %v122
  %v125 = vadd.f32 %v99, %v123
  %v126 = vld [vmem:[%s2] sm:$0x3]
  %v128 = vlaneseq
  %v129 = vshrl.u32 %v128, 7
  %v130 = vsub.s32 0, %v129
  %v131 = vrot.slane %v126, %v130
  %v132 = vlaneseq
  %v133 = vshrl.u32 %v132, 7
  %v134 = vsub.s32 1, %v133
  %v135 = vrot.slane %v126, %v134
  %v138 = vadd.f32 %v124, %v131
  %v139 = vadd.f32 %v125, %v135
  %v140 = vmax.f32 %v138, 0.0
  %v141 = vmax.f32 %v139, 0.0
  %v142 = vld [vmem:[%s3] sm:$0xff]
  %v143 = vld [vmem:[%s3 + $0x8] sm:$0xff]
  %v144 = vld [vmem:[%s3 + $0x10] sm:$0xff]
  %v145 = vld [vmem:[%s3 + $0x18] sm:$0xff]
  %v146 = vld [vmem:[%s3 + $0x20] sm:$0xff]
  %v147 = vld [vmem:[%s3 + $0x28] sm:$0xff]
  %v148 = vld [vmem:[%s3 + $0x30] sm:$0xff]
  %v149 = vld [vmem:[%s3 + $0x38] sm:$0xff]
  %v150 = vld [vmem:[%s3 + $0x40] sm:$0xff]
  %v151 = vld [vmem:[%s3 + $0x48] sm:$0xff]
  %v152 = vld [vmem:[%s3 + $0x50] sm:$0xff]
  %v153 = vld [vmem:[%s3 + $0x58] sm:$0xff]
  %v154 = vld [vmem:[%s3 + $0x60] sm:$0xff]
  %v155 = vld [vmem:[%s3 + $0x68] sm:$0xff]
  %v156 = vld [vmem:[%s3 + $0x70] sm:$0xff]
  %v157 = vld [vmem:[%s3 + $0x78] sm:$0xff]
  %v158 = vld [vmem:[%s3 + $0x80] sm:$0xff]
  %v159 = vld [vmem:[%s3 + $0x88] sm:$0xff]
  %v160 = vld [vmem:[%s3 + $0x90] sm:$0xff]
  %v161 = vld [vmem:[%s3 + $0x98] sm:$0xff]
  %v162 = vld [vmem:[%s3 + $0xa0] sm:$0xff]
  %v163 = vld [vmem:[%s3 + $0xa8] sm:$0xff]
  %v164 = vld [vmem:[%s3 + $0xb0] sm:$0xff]
  %v165 = vld [vmem:[%s3 + $0xb8] sm:$0xff]
  %v166 = vld [vmem:[%s3 + $0xc0] sm:$0xff]
  %v167 = vld [vmem:[%s3 + $0xc8] sm:$0xff]
  %v168 = vld [vmem:[%s3 + $0xd0] sm:$0xff]
  %v169 = vld [vmem:[%s3 + $0xd8] sm:$0xff]
  %v170 = vld [vmem:[%s3 + $0xe0] sm:$0xff]
  %v171 = vld [vmem:[%s3 + $0xe8] sm:$0xff]
  %v172 = vld [vmem:[%s3 + $0xf0] sm:$0xff]
  %v173 = vld [vmem:[%s3 + $0xf8] sm:$0xff]
  %v174 = vld [vmem:[%s4] sm:$0x1]
  %v176 = vlaneseq
  %v177 = vshrl.u32 %v176, 7
  %v178 = vsub.s32 0, %v177
  %v179 = vrot.slane %v174, %v178
  %181 = vmatprep.subr.mxu0 0.0
  %182 = vmatpush1.msra.mxu0 %v142
  %183 = vmatprep.subr.mxu0 0.0
  %184 = vmatpush1.msra.mxu0 %v143
  %185 = vmatprep.subr.mxu0 0.0
  %186 = vmatpush1.msra.mxu0 %v144
  %187 = vmatprep.subr.mxu0 0.0
  %188 = vmatpush1.msra.mxu0 %v145
  %189 = vmatprep.subr.mxu0 0.0
  %190 = vmatpush1.msra.mxu0 %v146
  %191 = vmatprep.subr.mxu0 0.0
  %192 = vmatpush1.msra.mxu0 %v147
  %193 = vmatprep.subr.mxu0 0.0
  %194 = vmatpush1.msra.mxu0 %v148
  %195 = vmatprep.subr.mxu0 0.0
  %196 = vmatpush1.msra.mxu0 %v149
  %197 = vmatprep.subr.mxu0 0.0
  %198 = vmatpush1.msra.mxu0 %v150
  %199 = vmatprep.subr.mxu0 0.0
  %200 = vmatpush1.msra.mxu0 %v151
  %201 = vmatprep.subr.mxu0 0.0
  %202 = vmatpush1.msra.mxu0 %v152
  %203 = vmatprep.subr.mxu0 0.0
  %204 = vmatpush1.msra.mxu0 %v153
  %205 = vmatprep.subr.mxu0 0.0
  %206 = vmatpush1.msra.mxu0 %v154
  %207 = vmatprep.subr.mxu0 0.0
  %208 = vmatpush1.msra.mxu0 %v155
  %209 = vmatprep.subr.mxu0 0.0
  %210 = vmatpush1.msra.mxu0 %v156
  %211 = vmatprep.subr.mxu0 0.0
  %212 = vmatpush1.msra.mxu0 %v157
  %213 = vmatprep.subr.mxu0 0.0
  %214 = vmatpush1.msra.mxu0 %v158
  %215 = vmatprep.subr.mxu0 0.0
  %216 = vmatpush1.msra.mxu0 %v159
  %217 = vmatprep.subr.mxu0 0.0
  %218 = vmatpush1.msra.mxu0 %v160
  %219 = vmatprep.subr.mxu0 0.0
  %220 = vmatpush1.msra.mxu0 %v161
  %221 = vmatprep.subr.mxu0 0.0
  %222 = vmatpush1.msra.mxu0 %v162
  %223 = vmatprep.subr.mxu0 0.0
  %224 = vmatpush1.msra.mxu0 %v163
  %225 = vmatprep.subr.mxu0 0.0
  %226 = vmatpush1.msra.mxu0 %v164
  %227 = vmatprep.subr.mxu0 0.0
  %228 = vmatpush1.msra.mxu0 %v165
  %229 = vmatprep.subr.mxu0 0.0
  %230 = vmatpush1.msra.mxu0 %v166
  %231 = vmatprep.subr.mxu0 0.0
  %232 = vmatpush1.msra.mxu0 %v167
  %233 = vmatprep.subr.mxu0 0.0
  %234 = vmatpush1.msra.mxu0 %v168
  %235 = vmatprep.subr.mxu0 0.0
  %236 = vmatpush1.msra.mxu0 %v169
  %237 = vmatprep.subr.mxu0 0.0
  %238 = vmatpush1.msra.mxu0 %v170
  %239 = vmatprep.subr.mxu0 0.0
  %240 = vmatpush1.msra.mxu0 %v171
  %241 = vmatprep.subr.mxu0 0.0
  %242 = vmatpush1.msra.mxu0 %v172
  %243 = vmatprep.subr.mxu0 0.0
  %244 = vmatpush1.msra.mxu0 %v173
  %245 = vmatprep.mubr.f32.mxu0 %v141
  %246 = vmatmul.mubr.f32.gmra.mrb[0].mxu0 %v140
  %v247 = vpop.f32.mrb[0].mxu0
  %v248 = vadd.f32 %v179, %v247
  %v249 = vpop.f32.mrb[0].mxu0
  %250 = vdwg.mxu0
  %251 = vst [vmem:[%s5] sm:$0xff] %v248
  // Predicated region
  $region22: #{qnet_forward.1} parent=0 // pred_check
    _
  $region23: #{qnet_forward.1} parent=0 // pred_check_branch
    %253 = sbr.rel (0) target = $region25
  $region24: #{qnet_forward.1} parent=0 // pred_region
    _
  $region25: #{qnet_forward.1} parent=0 // pred_fallthru
    _
  // Predicated region
  $region26: #{qnet_forward.1} parent=0 // pred_check
    _
  $region27: #{qnet_forward.1} parent=0 // pred_check_branch
    %255 = sbr.rel (0) target = $region29
  $region28: #{qnet_forward.1} parent=0 // pred_region
    _
  $region29: #{qnet_forward.1} parent=0 // pred_fallthru
    _

</llo_original>
